<compile_context>
chip_gen: v7x
topology: tpu7x:2x2x1
jax: 0.10.0
libtpu: 0.0.40
codegen_flags: <defaults>
</compile_context>

<pallas_src>
import jax
import jax.numpy as jnp
from jax import lax
from jax.experimental import pallas as pl
from jax.experimental.pallas import tpu as pltpu

LN_EPS = 1e-5


def _round_up(x, m):
    return (x + m - 1) // m * m


def _pick_tile_rows(n, d, itemsize):
    # Target ~1 MiB of gathered rows per grid step (amortizes the ~0.35 us
    # per-step overhead), power-of-two rows in [8, 2048], clamped so tiny
    # problems are not grossly over-padded.
    t = (1 << 20) // max(d * itemsize, 1)
    t = max(8, min(2048, t))
    t = 1 << (t.bit_length() - 1)                       # floor to power of two
    n_cap = 1 << max(3, (max(n, 1) - 1).bit_length())   # smallest pow2 >= n, >= 8
    return min(t, n_cap)


def _vmem_limit(need_bytes):
    # Generous headroom, but never above v7x's 64 MiB physical per-core VMEM.
    return int(min(64 * 2**20, max(8 * 2**20, need_bytes + 4 * 2**20)))


def _layernorm_affine(emb_f32, gb_ref):
    # LayerNorm over the last dim (biased variance, eps=1e-5) + affine.
    d = emb_f32.shape[-1]
    inv_d = jnp.float32(1.0 / d)
    mean = jnp.sum(emb_f32, axis=-1, keepdims=True) * inv_d
    centered = emb_f32 - mean
    var = jnp.sum(centered * centered, axis=-1, keepdims=True) * inv_d
    inv_std = lax.rsqrt(var + jnp.float32(LN_EPS))
    gamma = gb_ref[0:1, :].astype(jnp.float32)
    beta = gb_ref[1:2, :].astype(jnp.float32)
    return centered * inv_std * gamma + beta


# ---------------------------------------------------------------------------
# Fast path: table resident in VMEM, gather = one-hot @ table on the MXU.
# ---------------------------------------------------------------------------
def _cve_onehot_kernel(ids_ref, table_ref, gb_ref, out_ref):
    # ids_ref:   (TILE, 1) int32   VMEM
    # table_ref: (V, D)            VMEM (constant index_map -> resident)
    # gb_ref:    (2, D)    f32     VMEM (row 0 = gamma, row 1 = beta)
    # out_ref:   (TILE, D)         VMEM
    ids = ids_ref[...]                                            # (TILE, 1)
    vocab = lax.broadcasted_iota(
        jnp.int32, (ids.shape[0], table_ref.shape[0]), 1)         # (TILE, V)
    one_hot = (vocab == ids).astype(table_ref.dtype)              # exact 0/1
    emb = jnp.dot(one_hot, table_ref[...],
                  preferred_element_type=jnp.float32)             # (TILE, D) f32
    out_ref[...] = _layernorm_affine(emb, gb_ref).astype(out_ref.dtype)


# ---------------------------------------------------------------------------
# Fallback: table in HBM, chunked + double-buffered per-row DMA gather.
# ---------------------------------------------------------------------------
def _cve_hbm_gather_kernel(ids_ref, table_ref, gb_ref, out_ref, gather_ref, sem):
    # ids_ref:    (N_pad,)           int32 SMEM (scalar prefetch)
    # table_ref:  (V, D)             HBM   (memory_space=pl.ANY)
    # gb_ref:     (2, D)      f32    VMEM
    # out_ref:    (TILE, D)          VMEM
    # gather_ref: (2, CHUNK, D)      VMEM double-buffered landing zone
    # sem:        (2,)               one DMA semaphore per buffer slot
    tile_rows = out_ref.shape[0]
    chunk_rows = gather_ref.shape[1]
    n_chunks = tile_rows // chunk_rows
    base = pl.program_id(0) * tile_rows

    def start_chunk(row0, slot):
        # Issue one native-width row DMA per token; all signal sem[slot].
        # Unrolled so the scalar unit keeps the DMA-descriptor slot fed.
        def body(r, carry):
            row = ids_ref[base + row0 + r]
            pltpu.make_async_copy(
                table_ref.at[pl.ds(row, 1), :],
                gather_ref.at[slot, pl.ds(r, 1), :],
                sem.at[slot],
            ).start()
            return carry
        lax.fori_loop(0, chunk_rows, body, 0, unroll=8)

    def wait_chunk(slot):
        # Coarse wait: DMA semaphores count bytes and the chunk's row copies
        # tile this (CHUNK, D) buffer exactly, so a single wait sized as the
        # whole buffer drains sem[slot].  A wait moves no data; src is only
        # used for sizing and is intentionally the same region as dst.
        pltpu.make_async_copy(
            gather_ref.at[slot], gather_ref.at[slot], sem.at[slot]).wait()

    start_chunk(0, 0)
    for c in range(n_chunks):                # static; unrolled at trace time
        slot = c & 1
        wait_chunk(slot)
        if c + 1 < n_chunks:                 # prefetch next chunk while this
            start_chunk((c + 1) * chunk_rows, 1 - slot)   # one is normalized
        emb = gather_ref[slot].astype(jnp.float32)        # (CHUNK, D)
        y = _layernorm_affine(emb, gb_ref)
        out_ref[pl.ds(c * chunk_rows, chunk_rows), :] = y.astype(out_ref.dtype)


# ---------------------------------------------------------------------------
# Wrapper
# ---------------------------------------------------------------------------
def category_value_encoder(ids, table, gamma, beta, *, use_vmem_table=None):
    """CategoryValueEncoder.forward: embedding lookup + LayerNorm.

    ids: (B, S) integer ids; table: (V, D); gamma/beta: (D,).
    Returns (B, S, D) in table.dtype.
    """
    B, S = ids.shape
    V, D = table.shape
    N = B * S
    tab_dtype = table.dtype
    itemsize = jnp.dtype(tab_dtype).itemsize

    table_bytes = V * D * itemsize
    if use_vmem_table is None:
        # Keep (double-buffer-able) table residency + per-tile one-hot well
        # under every generation's VMEM budget (v5e 16 MiB scoped default,
        # v7x 64 MiB physical).
        use_vmem_table = (table_bytes <= 8 * 2**20) and (V <= 2048)

    tile_rows = _pick_tile_rows(N, D, itemsize)
    if use_vmem_table:
        # Keep the per-tile one-hot side input modest (~2 MiB).
        cap = max(8, (2 << 20) // max(V * itemsize, 1))
        tile_rows = min(tile_rows, 1 << (cap.bit_length() - 1))
    n_pad = _round_up(N, tile_rows)
    n_tiles = n_pad // tile_rows

    # torch.nn.Embedding raises on out-of-range ids; we clamp instead so the
    # gather can never read outside the table (jnp.take-style semantics).
    ids_flat = jnp.clip(ids.reshape(-1).astype(jnp.int32), 0, V - 1)
    ids_flat = jnp.pad(ids_flat, (0, n_pad - N))        # padded rows gather row 0

    gb = jnp.stack([gamma.astype(jnp.float32),
                    beta.astype(jnp.float32)])          # (2, D)

    out_shape = jax.ShapeDtypeStruct((n_pad, D), tab_dtype)
    out_block = (tile_rows, D)

    # Memory-bound cost hint: native-dtype gather reads + output writes.
    bytes_accessed = 2 * n_pad * D * itemsize + n_pad * 4 + 2 * D * 4
    if use_vmem_table:
        bytes_accessed += table_bytes                   # one-time table load
    cost = pl.CostEstimate(flops=8 * n_pad * D, transcendentals=n_pad,
                           bytes_accessed=int(bytes_accessed))

    if use_vmem_table:
        vmem_need = (2 * table_bytes                    # resident table (2 bufs)
                     + 2 * tile_rows * D * itemsize     # output double-buffer
                     + 2 * tile_rows * 4                # ids double-buffer
                     + tile_rows * V * 4 + 4 * D * 4)   # one-hot + gamma/beta
        out = pl.pallas_call(
            _cve_onehot_kernel,
            out_shape=out_shape,
            grid=(n_tiles,),
            in_specs=[
                pl.BlockSpec((tile_rows, 1), lambda i: (i, 0)),   # ids (VMEM)
                pl.BlockSpec((V, D), lambda i: (0, 0)),           # resident table
                pl.BlockSpec((2, D), lambda i: (0, 0)),           # gamma/beta
            ],
            out_specs=pl.BlockSpec(out_block, lambda i: (i, 0)),
            compiler_params=pltpu.CompilerParams(
                dimension_semantics=("parallel",),
                vmem_limit_bytes=_vmem_limit(vmem_need)),
            cost_estimate=cost,
        )(ids_flat.reshape(n_pad, 1), table, gb)
    else:
        chunk_rows = min(64, tile_rows)                 # tile_rows is pow2 -> divides
        vmem_need = (2 * chunk_rows * D * itemsize      # gather double-buffer
                     + 2 * tile_rows * D * itemsize     # output double-buffer
                     + 4 * D * 4)
        out = pl.pallas_call(
            _cve_hbm_gather_kernel,
            out_shape=out_shape,
            grid_spec=pltpu.PrefetchScalarGridSpec(
                num_scalar_prefetch=1,                  # ids -> SMEM
                grid=(n_tiles,),
                in_specs=[
                    pl.BlockSpec(memory_space=pl.ANY),              # table in HBM
                    pl.BlockSpec((2, D), lambda i, ids: (0, 0)),    # gamma/beta
                ],
                out_specs=pl.BlockSpec(out_block, lambda i, ids: (i, 0)),
                scratch_shapes=[
                    pltpu.VMEM((2, chunk_rows, D), tab_dtype),      # gather bufs
                    pltpu.SemaphoreType.DMA((2,)),                  # per-slot sems
                ],
            ),
            compiler_params=pltpu.CompilerParams(
                dimension_semantics=("parallel",),
                vmem_limit_bytes=_vmem_limit(vmem_need)),
            cost_estimate=cost,
        )(ids_flat, table, gb)

    return out[:N].reshape(B, S, D)


def _reference(ids, table, gamma, beta):
    emb = jnp.take(table, ids, axis=0)
    mean = jnp.mean(emb, axis=-1, keepdims=True)
    var = jnp.mean((emb - mean) ** 2, axis=-1, keepdims=True)
    return (emb - mean) * lax.rsqrt(var + LN_EPS) * gamma + beta


if __name__ == "__main__":
    key = jax.random.PRNGKey(0)
    k_ids, k_emb, k_g, k_b = jax.random.split(key, 4)

    B, S = 2, 8              # batch, sequence
    V, D = 64, 32            # num_embeddings, embedding_dim
    padding_idx = 0

    # nn.Embedding ~ N(0, 1) with the padding row zeroed; LayerNorm affine
    # parameters perturbed from their (1, 0) init to exercise the affine path.
    table = jax.random.normal(k_emb, (V, D), dtype=jnp.float32)
    table = table.at[padding_idx].set(0.0)
    gamma = 1.0 + 0.1 * jax.random.normal(k_g, (D,), dtype=jnp.float32)
    beta = 0.1 * jax.random.normal(k_b, (D,), dtype=jnp.float32)

    ids = jax.random.randint(k_ids, (B, S), 0, V, dtype=jnp.int32)

    out = jax.block_until_ready(category_value_encoder(ids, table, gamma, beta))
    ref = _reference(ids, table, gamma, beta)

    assert out.shape == (B, S, D)
    assert out.dtype == table.dtype
    assert jnp.allclose(out, ref, atol=1e-5, rtol=1e-5), "mismatch vs reference"

    print("KERNEL_OK")
</pallas_src>

<mosaic_0001>
module attributes {stable_mosaic.version = 11 : i64} {
  func.func @_cve_onehot_kernel(%arg0: i32, %arg1: memref<16x1xi32, #tpu.memory_space<vmem>>, %arg2: memref<64x32xf32, #tpu.memory_space<vmem>>, %arg3: memref<2x32xf32, #tpu.memory_space<vmem>>, %arg4: memref<16x32xf32, #tpu.memory_space<vmem>>) attributes {dimension_semantics = [#tpu.dimension_semantics<parallel>], iteration_bounds = array<i64: 1>, scalar_prefetch = 0 : i64, scratch_operands = 0 : i64, tpu.core_type = #tpu.core_type<tc>, window_params = [{transform_indices = @transform_0, window_bounds = array<i64: 16, 1>}, {pipeline_mode = #tpu.pipeline_mode<synchronous>, transform_indices = @transform_1, window_bounds = array<i64: 64, 32>}, {pipeline_mode = #tpu.pipeline_mode<synchronous>, transform_indices = @transform_2, window_bounds = array<i64: 2, 32>}, {transform_indices = @transform_3, window_bounds = array<i64: 16, 32>}]} {
    %c0 = arith.constant 0 : index
    %c0_0 = arith.constant 0 : index
    %0 = vector.load %arg1[%c0, %c0_0] : memref<16x1xi32, #tpu.memory_space<vmem>>, vector<16x1xi32>
    %1 = tpu.iota {dimensions = array<i32: 1>} : vector<16x64xi32>
    %2 = vector.broadcast %0 : vector<16x1xi32> to vector<16x64xi32>
    %3 = arith.cmpi eq, %1, %2 : vector<16x64xi32>
    %4 = arith.extui %3 : vector<16x64xi1> to vector<16x64xi32>
    %5 = arith.sitofp %4 : vector<16x64xi32> to vector<16x64xf32>
    %c0_1 = arith.constant 0 : index
    %c0_2 = arith.constant 0 : index
    %6 = vector.load %arg2[%c0_1, %c0_2] : memref<64x32xf32, #tpu.memory_space<vmem>>, vector<64x32xf32>
    %cst = arith.constant dense<0.000000e+00> : vector<16x32xf32>
    %7 = tpu.matmul %5, %6, %cst {dimension_numbers = #tpu.dot_dimension_numbers<[1], [0], [0], [1], [0, 0, 1, 1], [], []>} : vector<16x64xf32>, vector<64x32xf32>, vector<16x32xf32> -> vector<16x32xf32>
    %cst_3 = arith.constant dense<0.000000e+00> : vector<16xf32>
    %8 = vector.multi_reduction <add>, %7, %cst_3 [1] : vector<16x32xf32> to vector<16xf32>
    %9 = vector.shape_cast %8 : vector<16xf32> to vector<16x1xf32>
    %cst_4 = arith.constant 3.125000e-02 : f32
    %10 = vector.broadcast %cst_4 : f32 to vector<16x1xf32>
    %11 = arith.mulf %9, %10 : vector<16x1xf32>
    %12 = vector.broadcast %11 : vector<16x1xf32> to vector<16x32xf32>
    %13 = arith.subf %7, %12 : vector<16x32xf32>
    %14 = arith.mulf %13, %13 : vector<16x32xf32>
    %cst_5 = arith.constant dense<0.000000e+00> : vector<16xf32>
    %15 = vector.multi_reduction <add>, %14, %cst_5 [1] : vector<16x32xf32> to vector<16xf32>
    %16 = vector.shape_cast %15 : vector<16xf32> to vector<16x1xf32>
    %cst_6 = arith.constant 3.125000e-02 : f32
    %17 = vector.broadcast %cst_6 : f32 to vector<16x1xf32>
    %18 = arith.mulf %16, %17 : vector<16x1xf32>
    %cst_7 = arith.constant 9.99999974E-6 : f32
    %19 = vector.broadcast %cst_7 : f32 to vector<16x1xf32>
    %20 = arith.addf %18, %19 : vector<16x1xf32>
    %21 = math.rsqrt %20 : vector<16x1xf32>
    %c0_8 = arith.constant 0 : index
    %c0_9 = arith.constant 0 : index
    %22 = vector.load %arg3[%c0_8, %c0_9] : memref<2x32xf32, #tpu.memory_space<vmem>>, vector<1x32xf32>
    %c1 = arith.constant 1 : index
    %c0_10 = arith.constant 0 : index
    %23 = vector.load %arg3[%c1, %c0_10] : memref<2x32xf32, #tpu.memory_space<vmem>>, vector<1x32xf32>
    %24 = vector.broadcast %21 : vector<16x1xf32> to vector<16x32xf32>
    %25 = arith.mulf %13, %24 : vector<16x32xf32>
    %26 = vector.broadcast %22 : vector<1x32xf32> to vector<16x32xf32>
    %27 = arith.mulf %25, %26 : vector<16x32xf32>
    %28 = vector.broadcast %23 : vector<1x32xf32> to vector<16x32xf32>
    %29 = arith.addf %27, %28 : vector<16x32xf32>
    %c0_11 = arith.constant 0 : index
    %c0_12 = arith.constant 0 : index
    %30 = vector.load %arg4[%c0_11, %c0_12] : memref<16x32xf32, #tpu.memory_space<vmem>>, vector<16x32xf32>
    tpu.vector_store %arg4[%c0_11, %c0_12], %29 {strides = array<i32>} : memref<16x32xf32, #tpu.memory_space<vmem>>, vector<16x32xf32>,
    return
  }
  func.func @transform_0(%arg0: i32) -> (i32, i32) {
    %c0_i32 = arith.constant 0 : i32
    %c0_i32_0 = arith.constant 0 : i32
    return %arg0, %c0_i32 : i32, i32
  }
  func.func @transform_1(%arg0: i32) -> (i32, i32) {
    %c0_i32 = arith.constant 0 : i32
    %c0_i32_0 = arith.constant 0 : i32
    %c0_i32_1 = arith.constant 0 : i32
    return %c0_i32, %c0_i32_0 : i32, i32
  }
  func.func @transform_2(%arg0: i32) -> (i32, i32) {
    %c0_i32 = arith.constant 0 : i32
    %c0_i32_0 = arith.constant 0 : i32
    %c0_i32_1 = arith.constant 0 : i32
    return %c0_i32, %c0_i32_0 : i32, i32
  }
  func.func @transform_3(%arg0: i32) -> (i32, i32) {
    %c0_i32 = arith.constant 0 : i32
    %c0_i32_0 = arith.constant 0 : i32
    return %arg0, %c0_i32 : i32, i32
  }
}

</mosaic_0001>

<llo_original>
// kernel: tpu_custom_call.1
$region0: #{tpu_custom_call.1}
  #allocation0 [shape = 'u32[]', space=smem, size = 0x4, offset = 0x4, fixed_abs, tag = 'smem constant byte address 0x4 - core index']
  #allocation1 [shape = 'u32[144,128]{1,0:T(1,128)}', space=vmem, size = 0x12000, scoped, tag = 'internal scratch']
  %s0 = inlined_call_operand.vmem [shape: s32[16,1], index: 0, kind: input, shape index: {}]
  %s1 = inlined_call_operand.vmem [shape: f32[64,32], index: 1, kind: input, shape index: {}]
  %s2 = inlined_call_operand.vmem [shape: f32[2,32], index: 2, kind: input, shape index: {}]
  %s3 = inlined_call_operand.hbm [shape: f32[16,32], index: 3, kind: output, shape index: {}]
  %s4 = sld [smem:[#allocation0]]
  $region22: #{tpu_custom_call.1} parent=0
    _
  %s6 = ssub.s32 1, %s4
  %s7 = scalar_select 0, %s6, %s4
  $region1: #{tpu_custom_call.1} parent=0
    #allocation2 [shape = 'u8[8192]{0}', space=vmem, size = 0x2000, scoped, tag = 'output window, operand 0, single buffered']
    #allocation3 [shape = 's32[1]{0}', space=sflag, size = 0x4, scoped, tag = 'scoped memory for tpu_custom_call.1']
    %8 = vsyncpa [#allocation3], 0
    // Predicated region
    $region2: #{tpu_custom_call.1} parent=1 // pred_check
      _
    $region3: #{tpu_custom_call.1} parent=1 // pred_check_branch
      %10 = sbr.rel (0) target = $region5
    $region4: #{tpu_custom_call.1} parent=1 // pred_region
      _
    $region5: #{tpu_custom_call.1} parent=1 // pred_fallthru
      _
    // Predicated region
    $region6: #{tpu_custom_call.1} parent=1 // pred_check
      _
    $region7: #{tpu_custom_call.1} parent=1 // pred_check_branch
      %12 = sbr.rel (0) target = $region9
    $region8: #{tpu_custom_call.1} parent=1 // pred_region
      _
    $region9: #{tpu_custom_call.1} parent=1 // pred_fallthru
      _
    // Predicated region
    $region10: #{tpu_custom_call.1} parent=1 // pred_check
      _
    $region11: #{tpu_custom_call.1} parent=1 // pred_check_branch
      %14 = sbr.rel (0) target = $region13
    $region12: #{tpu_custom_call.1} parent=1 // pred_region
      _
    $region13: #{tpu_custom_call.1} parent=1 // pred_fallthru
      _
    %v15 = vld [vmem:[%s0] sm:$0xff]
    %v16 = vld [vmem:[%s0 + $0x8] sm:$0xff]
    %v17 = vlaneseq
    %v18 = vand.u32 %v17, 127
    %19 = vset.pattern.permute.xlu0 0
    %20 = vperm.xlu0 %19, %v15
    %v21 = vpop.permute.xlu0 %20
    %22 = vset.pattern.permute.xlu0 0
    %23 = vperm.xlu0 %22, %v16
    %v24 = vpop.permute.xlu0 %23
    %vm25 = vcmp.eq.s32.totalorder %v18, %v21
    %vm26 = vcmp.eq.s32.totalorder %v18, %v24
    %v27 = vsel %vm25, 1, 0
    %v28 = vsel %vm26, 1, 0
    %v29 = vcvt.s32.f32 %v27
    %v30 = vcvt.s32.f32 %v28
    %v31 = vld [vmem:[%s1] sm:$0xff]
    %v32 = vld [vmem:[%s1 + $0x8] sm:$0xff]
    %v33 = vld [vmem:[%s1 + $0x10] sm:$0xff]
    %v34 = vld [vmem:[%s1 + $0x18] sm:$0xff]
    %v35 = vld [vmem:[%s1 + $0x20] sm:$0xff]
    %v36 = vld [vmem:[%s1 + $0x28] sm:$0xff]
    %v37 = vld [vmem:[%s1 + $0x30] sm:$0xff]
    %v38 = vld [vmem:[%s1 + $0x38] sm:$0xff]
    %vm39 = vcmask 523264
    %v41 = vsel %vm39, %v29, 0
    %v44 = vsel %vm39, %v30, 0
    %46 = vmatprep.subr.mxu0 0.0
    %47 = vmatpush1.msra.mxu0 %v31
    %48 = vmatprep.subr.mxu0 0.0
    %49 = vmatpush1.msra.mxu0 %v32
    %50 = vmatprep.subr.mxu0 0.0
    %51 = vmatpush1.msra.mxu0 %v33
    %52 = vmatprep.subr.mxu0 0.0
    %53 = vmatpush1.msra.mxu0 %v34
    %54 = vmatprep.subr.mxu0 0.0
    %55 = vmatpush1.msra.mxu0 %v35
    %56 = vmatprep.subr.mxu0 0.0
    %57 = vmatpush1.msra.mxu0 %v36
    %58 = vmatprep.subr.mxu0 0.0
    %59 = vmatpush1.msra.mxu0 %v37
    %60 = vmatprep.subr.mxu0 0.0
    %61 = vmatpush1.msra.mxu0 %v38
    %62 = vmatprep.subr.mxu0 0.0
    %63 = vmatpush1.msra.mxu0 0.0
    %64 = vmatprep.subr.mxu0 0.0
    %65 = vmatpush1.msra.mxu0 0.0
    %66 = vmatprep.subr.mxu0 0.0
    %67 = vmatpush1.msra.mxu0 0.0
    %68 = vmatprep.subr.mxu0 0.0
    %69 = vmatpush1.msra.mxu0 0.0
    %70 = vmatprep.subr.mxu0 0.0
    %71 = vmatpush1.msra.mxu0 0.0
    %72 = vmatprep.subr.mxu0 0.0
    %73 = vmatpush1.msra.mxu0 0.0
    %74 = vmatprep.subr.mxu0 0.0
    %75 = vmatpush1.msra.mxu0 0.0
    %76 = vmatprep.subr.mxu0 0.0
    %77 = vmatpush1.msra.mxu0 0.0
    %78 = vmatprep.subr.mxu0 0.0
    %79 = vmatpush1.msra.mxu0 0.0
    %80 = vmatprep.subr.mxu0 0.0
    %81 = vmatpush1.msra.mxu0 0.0
    %82 = vmatprep.subr.mxu0 0.0
    %83 = vmatpush1.msra.mxu0 0.0
    %84 = vmatprep.subr.mxu0 0.0
    %85 = vmatpush1.msra.mxu0 0.0
    %86 = vmatprep.subr.mxu0 0.0
    %87 = vmatpush1.msra.mxu0 0.0
    %88 = vmatprep.subr.mxu0 0.0
    %89 = vmatpush1.msra.mxu0 0.0
    %90 = vmatprep.subr.mxu0 0.0
    %91 = vmatpush1.msra.mxu0 0.0
    %92 = vmatprep.subr.mxu0 0.0
    %93 = vmatpush1.msra.mxu0 0.0
    %94 = vmatprep.subr.mxu0 0.0
    %95 = vmatpush1.msra.mxu0 0.0
    %96 = vmatprep.subr.mxu0 0.0
    %97 = vmatpush1.msra.mxu0 0.0
    %98 = vmatprep.subr.mxu0 0.0
    %99 = vmatpush1.msra.mxu0 0.0
    %100 = vmatprep.subr.mxu0 0.0
    %101 = vmatpush1.msra.mxu0 0.0
    %102 = vmatprep.subr.mxu0 0.0
    %103 = vmatpush1.msra.mxu0 0.0
    %104 = vmatprep.subr.mxu0 0.0
    %105 = vmatpush1.msra.mxu0 0.0
    %106 = vmatprep.subr.mxu0 0.0
    %107 = vmatpush1.msra.mxu0 0.0
    %108 = vmatprep.subr.mxu0 0.0
    %109 = vmatpush1.msra.mxu0 0.0
    %110 = vmatprep.mubr.f32.mxu0 0.0
    %111 = vmatmul.mubr.f32.gmra.mrb[0].mxu0 %v41
    %v112 = vpop.f32.mrb[0].mxu0
    %v113 = vadd.f32 0.0, %v112
    %v114 = vpop.f32.mrb[0].mxu0
    %115 = vmatprep.mubr.f32.mxu0 0.0
    %116 = vmatmul.mubr.f32.gmra.mrb[0].mxu0 %v44
    %v117 = vpop.f32.mrb[0].mxu0
    %v118 = vadd.f32 0.0, %v117
    %v119 = vpop.f32.mrb[0].mxu0
    %120 = vdwg.mxu0
    %vm121 = vcmask 261120
    %v122 = vsel %vm121, %v113, 0.0
    %123 = vadd.xlane.f32.xlu0 %v122
    %v124 = vpop.xlane.xlu0 %123
    %v125 = vsel %vm121, %v118, 0.0
    %126 = vadd.xlane.f32.xlu0 %v125
    %v127 = vpop.xlane.xlu0 %126
    %v128 = vmul.f32 %v124, 0.03125
    %v129 = vmul.f32 %v127, 0.03125
    %v130 = vsub.f32 %v113, %v128
    %v131 = vsub.f32 %v118, %v129
    %v132 = vmul.f32 %v130, %v130
    %v133 = vmul.f32 %v131, %v131
    %v134 = vsel %vm121, %v132, 0.0
    %135 = vadd.xlane.f32.xlu0 %v134
    %v136 = vpop.xlane.xlu0 %135
    %v137 = vsel %vm121, %v133, 0.0
    %138 = vadd.xlane.f32.xlu0 %v137
    %v139 = vpop.xlane.xlu0 %138
    %v140 = vmul.f32 %v136, 0.03125
    %v141 = vmul.f32 %v139, 0.03125
    %v142 = vadd.f32 %v140, 1e-05
    %v143 = vadd.f32 %v141, 1e-05
    %v144 = vrsqrt.pop %v142
    %v145 = vrsqrt.pop %v143
    %v146 = vld [vmem:[%s2] sm:$0x1]
    %v147 = vld [vmem:[%s2 + $0x1] sm:$0x1]
    %v148 = vmul.f32 %v130, %v144
    %v149 = vmul.f32 %v131, %v145
    %v150 = vlaneseq
    %v151 = vshrl.u32 %v150, 7
    %v152 = vsub.s32 0, %v151
    %v153 = vrot.slane %v146, %v152
    %v154 = vmul.f32 %v148, %v153
    %v155 = vmul.f32 %v149, %v153
    %v156 = vlaneseq
    %v157 = vshrl.u32 %v156, 7
    %v158 = vsub.s32 0, %v157
    %v159 = vrot.slane %v147, %v158
    %v160 = vadd.f32 %v154, %v159
    %v161 = vadd.f32 %v155, %v159
    %162 = vst.msk [vmem:[#allocation2] sm:$0xff] %vm121, %v160
    %163 = vst.msk [vmem:[#allocation2 + $0x8] sm:$0xff] %vm121, %v161
    // Predicated region
    $region14: #{tpu_custom_call.1} parent=1 // pred_check
      _
    $region15: #{tpu_custom_call.1} parent=1 // pred_check_branch
      %165 = sbr.rel (0) target = $region17
    $region16: #{tpu_custom_call.1} parent=1 // pred_region
      %s167 = ssub.s32 256, 256
      %168 = vsyncadd [#allocation3], %s167
      %s169 = sshll.u32 [#allocation2], 4
      %s170 = int_to_ptr.vmem [resolvable:$true] %s169
      %175 = dma.vmem_to_hbm [thread:$0]  %s170, 256, %s3, [#allocation3], 128, 128, 8
    $region17: #{tpu_custom_call.1} parent=1 // pred_fallthru
      _
    // Predicated region
    $region18: #{tpu_custom_call.1} parent=1 // pred_check
      _
    $region19: #{tpu_custom_call.1} parent=1 // pred_check_branch
      %177 = sbr.rel (0) target = $region21
    $region20: #{tpu_custom_call.1} parent=1 // pred_region
      %178 = dma.done [#allocation3], 256
    $region21: #{tpu_custom_call.1} parent=1 // pred_fallthru
      _
    %179 = vsyncpa [#allocation3], 1

</llo_original>
